<compile_context>
chip_gen: v7x
topology: tpu7x:2x2x1
jax: 0.10.0
libtpu: 0.0.40
codegen_flags: <defaults>
</compile_context>

<pallas_src>
import jax
import jax.numpy as jnp
from jax.experimental import pallas as pl
from jax.experimental.pallas import tpu as pltpu

BN_EPS = 1e-5


def utterance_net_kernel(x_ref, w_ref, b_ref, o_ref):
    # BN already folded into w/b; dropout is identity at eval time.
    # MXU matmul with f32 accumulation, bias + ReLU in f32 on the VPU,
    # cast (if any) only at the final store.
    x = x_ref[...].astype(w_ref.dtype)                                   # no-op for f32
    h = jnp.dot(x, w_ref[...], preferred_element_type=jnp.float32)       # (TB, H2) f32
    o_ref[...] = jnp.maximum(h + b_ref[...], 0.0).astype(o_ref.dtype)


def _choose_batch_tile(B, block_b):
    """Pick a batch tile: big (amortize per-step overhead), but >= 2 balanced tiles
    when there is enough work so v7x's two TensorCores both get a grid step."""
    n_tiles = max(1, pl.cdiv(B, block_b))
    if n_tiles == 1 and B >= 16:
        n_tiles = 2
    tb = max(8, pl.cdiv(pl.cdiv(B, n_tiles), 8) * 8)
    return tb


def utterance_net_forward(x, running_mean, running_var, gamma, beta, w_t, b,
                          *, block_b=4096, mxu_dtype=jnp.float32,
                          out_dtype=jnp.float32):
    """relu(Linear(BatchNorm1d_eval(x))) via a single fused Pallas kernel.

    x:            (B, F) float32
    running_mean: (1, F), running_var: (1, F), gamma: (1, F), beta: (1, F)
    w_t:          (F, 2H)  (pre-transposed nn.Linear weight)
    b:            (1, 2H)
    """
    B, F = x.shape
    H2 = w_t.shape[1]

    # ---- parameter prep (host/XLA side, once per parameter set) -----------------
    scale = (gamma * jax.lax.rsqrt(running_var + BN_EPS)).reshape(1, F)   # (1, F)
    shift = (beta - running_mean * scale).reshape(1, F)                   # (1, F)
    w_fused = (w_t * scale.reshape(F, 1)).astype(mxu_dtype)               # (F, H2)
    b_fused = (b.reshape(1, H2) + shift @ w_t).astype(jnp.float32)        # (1, H2)

    # ---- batch tiling: no padding, no wrapper copies -----------------------------
    TB = _choose_batch_tile(B, block_b)
    grid = (pl.cdiv(B, TB),)

    w_bytes = F * H2 * jnp.dtype(mxu_dtype).itemsize
    out_bytes = B * H2 * jnp.dtype(out_dtype).itemsize
    cost = pl.CostEstimate(
        flops=2 * B * F * H2,
        transcendentals=0,
        bytes_accessed=B * F * 4 + w_bytes + H2 * 4 + out_bytes,
    )

    out = pl.pallas_call(
        utterance_net_kernel,
        out_shape=jax.ShapeDtypeStruct((B, H2), out_dtype),
        grid=grid,
        in_specs=[
            pl.BlockSpec((TB, F), lambda i: (i, 0)),     # activations: tiled over batch
            pl.BlockSpec((F, H2), lambda i: (0, 0)),     # fused weight: resident
            pl.BlockSpec((1, H2), lambda i: (0, 0)),     # fused bias: resident
        ],
        out_specs=pl.BlockSpec((TB, H2), lambda i: (i, 0)),
        compiler_params=pltpu.CompilerParams(
            dimension_semantics=("parallel",)),          # shard batch tiles across TCs
        cost_estimate=cost,
    )(x, w_fused, b_fused)

    return out


def reference_forward(x, running_mean, running_var, gamma, beta, w_t, b):
    normed = (x - running_mean) * jax.lax.rsqrt(running_var + BN_EPS) * gamma + beta
    return jnp.maximum(normed @ w_t + b, 0.0)


def _make_params(key, input_size, h2):
    k_g, k_b, k_w, k_bias, k_m, k_v = jax.random.split(key, 6)
    running_mean = 0.1 * jax.random.normal(k_m, (1, input_size), dtype=jnp.float32)
    running_var = jnp.abs(jax.random.normal(k_v, (1, input_size), dtype=jnp.float32)) + 0.5
    gamma = 1.0 + 0.1 * jax.random.normal(k_g, (1, input_size), dtype=jnp.float32)
    beta = 0.1 * jax.random.normal(k_b, (1, input_size), dtype=jnp.float32)
    # nn.Linear(input_size, 2*hidden): weight (2H, F), bias (2H,) -> store W^T = (F, 2H)
    w = 0.1 * jax.random.normal(k_w, (h2, input_size), dtype=jnp.float32)
    w_t = jnp.transpose(w)
    bias = 0.1 * jax.random.normal(k_bias, (1, h2), dtype=jnp.float32)
    return running_mean, running_var, gamma, beta, w_t, bias


if __name__ == "__main__":
    INPUT_SIZE = 32     # input_size
    HIDDEN = 32         # args.hidden_layer
    H2 = 2 * HIDDEN

    key = jax.random.PRNGKey(0)
    k_params, k_x_small, k_x_big = jax.random.split(key, 3)
    params = _make_params(k_params, INPUT_SIZE, H2)

    # 1) Small batch (single grid step), f32 — tight check vs reference.
    x_small = jax.random.normal(k_x_small, (8, INPUT_SIZE), dtype=jnp.float32)
    out_small = jax.block_until_ready(utterance_net_forward(x_small, *params))
    ref_small = reference_forward(x_small, *params)
    assert out_small.shape == (8, H2)
    assert jnp.allclose(out_small, ref_small, atol=1e-4, rtol=1e-4), "f32 small-batch mismatch"

    # 2) Non-multiple batch (2 balanced grid steps + masked tail block, no padding), f32.
    x_big = jax.random.normal(k_x_big, (300, INPUT_SIZE), dtype=jnp.float32)
    out_big = jax.block_until_ready(utterance_net_forward(x_big, *params))
    ref_big = reference_forward(x_big, *params)
    assert out_big.shape == (300, H2)
    assert out_big.dtype == jnp.float32
    assert jnp.allclose(out_big, ref_big, atol=1e-4, rtol=1e-4), "f32 large-batch mismatch"

    # 3) Same batch with bf16 MXU operands and bf16 output store (f32 accumulate /
    #    elementwise inside) — looser check. Note: folding BN scale into bf16 weights
    #    loses precision when running_var is tiny; acceptable under this tolerance.
    out_bf16 = jax.block_until_ready(
        utterance_net_forward(x_big, *params,
                              mxu_dtype=jnp.bfloat16, out_dtype=jnp.bfloat16))
    assert out_bf16.shape == (300, H2)
    assert out_bf16.dtype == jnp.bfloat16
    assert jnp.allclose(out_bf16.astype(jnp.float32), ref_big,
                        atol=5e-2, rtol=5e-2), "bf16 mismatch"

    print("KERNEL_OK")
</pallas_src>

<mosaic_0001>
module attributes {stable_mosaic.version = 11 : i64} {
  func.func @utterance_net_kernel(%arg0: i32, %arg1: memref<8x32xf32, #tpu.memory_space<vmem>>, %arg2: memref<32x64xf32, #tpu.memory_space<vmem>>, %arg3: memref<1x64xf32, #tpu.memory_space<vmem>>, %arg4: memref<8x64xf32, #tpu.memory_space<vmem>>) attributes {dimension_semantics = [#tpu.dimension_semantics<parallel>], iteration_bounds = array<i64: 1>, scalar_prefetch = 0 : i64, scratch_operands = 0 : i64, tpu.core_type = #tpu.core_type<tc>, window_params = [{transform_indices = @transform_0, window_bounds = array<i64: 8, 32>}, {pipeline_mode = #tpu.pipeline_mode<synchronous>, transform_indices = @transform_1, window_bounds = array<i64: 32, 64>}, {pipeline_mode = #tpu.pipeline_mode<synchronous>, transform_indices = @transform_2, window_bounds = array<i64: 1, 64>}, {transform_indices = @transform_3, window_bounds = array<i64: 8, 64>}]} {
    %c0 = arith.constant 0 : index
    %c0_0 = arith.constant 0 : index
    %0 = vector.load %arg1[%c0, %c0_0] : memref<8x32xf32, #tpu.memory_space<vmem>>, vector<8x32xf32>
    %c0_1 = arith.constant 0 : index
    %c0_2 = arith.constant 0 : index
    %1 = vector.load %arg2[%c0_1, %c0_2] : memref<32x64xf32, #tpu.memory_space<vmem>>, vector<32x64xf32>
    %cst = arith.constant dense<0.000000e+00> : vector<8x64xf32>
    %2 = tpu.matmul %0, %1, %cst {dimension_numbers = #tpu.dot_dimension_numbers<[1], [0], [0], [1], [0, 0, 1, 1], [], []>} : vector<8x32xf32>, vector<32x64xf32>, vector<8x64xf32> -> vector<8x64xf32>
    %c0_3 = arith.constant 0 : index
    %c0_4 = arith.constant 0 : index
    %3 = vector.load %arg3[%c0_3, %c0_4] : memref<1x64xf32, #tpu.memory_space<vmem>>, vector<1x64xf32>
    %4 = vector.broadcast %3 : vector<1x64xf32> to vector<8x64xf32>
    %5 = arith.addf %2, %4 : vector<8x64xf32>
    %cst_5 = arith.constant 0.000000e+00 : f32
    %6 = vector.broadcast %cst_5 : f32 to vector<8x64xf32>
    %7 = arith.maximumf %5, %6 : vector<8x64xf32>
    %c0_6 = arith.constant 0 : index
    %c0_7 = arith.constant 0 : index
    %8 = vector.load %arg4[%c0_6, %c0_7] : memref<8x64xf32, #tpu.memory_space<vmem>>, vector<8x64xf32>
    tpu.vector_store %arg4[%c0_6, %c0_7], %7 {strides = array<i32>} : memref<8x64xf32, #tpu.memory_space<vmem>>, vector<8x64xf32>,
    return
  }
  func.func @transform_0(%arg0: i32) -> (i32, i32) {
    %c0_i32 = arith.constant 0 : i32
    %c0_i32_0 = arith.constant 0 : i32
    return %arg0, %c0_i32 : i32, i32
  }
  func.func @transform_1(%arg0: i32) -> (i32, i32) {
    %c0_i32 = arith.constant 0 : i32
    %c0_i32_0 = arith.constant 0 : i32
    %c0_i32_1 = arith.constant 0 : i32
    return %c0_i32, %c0_i32_0 : i32, i32
  }
  func.func @transform_2(%arg0: i32) -> (i32, i32) {
    %c0_i32 = arith.constant 0 : i32
    %c0_i32_0 = arith.constant 0 : i32
    %c0_i32_1 = arith.constant 0 : i32
    return %c0_i32, %c0_i32_0 : i32, i32
  }
  func.func @transform_3(%arg0: i32) -> (i32, i32) {
    %c0_i32 = arith.constant 0 : i32
    %c0_i32_0 = arith.constant 0 : i32
    return %arg0, %c0_i32 : i32, i32
  }
}

</mosaic_0001>

<llo_original>
// kernel: tpu_custom_call.1
$region0: #{tpu_custom_call.1}
  #allocation0 [shape = 'u32[]', space=smem, size = 0x4, offset = 0x4, fixed_abs, tag = 'smem constant byte address 0x4 - core index']
  #allocation1 [shape = 'u32[144,128]{1,0:T(1,128)}', space=vmem, size = 0x12000, scoped, tag = 'internal scratch']
  %s0 = inlined_call_operand.hbm [shape: f32[8,32], index: 0, kind: input, shape index: {}]
  %s1 = inlined_call_operand.hbm [shape: f32[32,64], index: 1, kind: input, shape index: {}]
  %s2 = inlined_call_operand.vmem [shape: f32[1,64], index: 2, kind: input, shape index: {}]
  %s3 = inlined_call_operand.hbm [shape: f32[8,64], index: 3, kind: output, shape index: {}]
  %s4 = sld [smem:[#allocation0]]
  $region30: #{tpu_custom_call.1} parent=0
    _
  %s6 = ssub.s32 1, %s4
  %s7 = scalar_select 0, %s6, %s4
  $region1: #{tpu_custom_call.1} parent=0
    #allocation2 [shape = 'u8[4096]{0}', space=vmem, size = 0x1000, scoped, tag = 'input window, operand 0, single buffered']
    #allocation3 [shape = 's32[1]{0}', space=sflag, size = 0x4, scoped, tag = 'scoped memory for tpu_custom_call.1']
    #allocation4 [shape = 's32[1]{0}', space=sflag, size = 0x4, scoped, tag = 'scoped memory for tpu_custom_call.1']
    #allocation5 [shape = 'u8[16384]{0}', space=vmem, size = 0x4000, scoped, tag = 'input window, operand 1, single buffered']
    #allocation6 [shape = 's32[1]{0}', space=sflag, size = 0x4, scoped, tag = 'scoped memory for tpu_custom_call.1']
    #allocation7 [shape = 'u8[4096]{0}', space=vmem, size = 0x1000, scoped, tag = 'output window, operand 0, single buffered']
    %8 = vsyncpa [#allocation3], 0
    %9 = vsyncpa [#allocation6], 0
    %10 = vsyncpa [#allocation4], 0
    // Predicated region
    $region2: #{tpu_custom_call.1} parent=1 // pred_check
      _
    $region3: #{tpu_custom_call.1} parent=1 // pred_check_branch
      %12 = sbr.rel (0) target = $region5
    $region4: #{tpu_custom_call.1} parent=1 // pred_region
      %s14 = ssub.s32 128, 128
      %15 = vsyncadd [#allocation3], %s14
      %s17 = sshll.u32 [#allocation2], 4
      %s18 = int_to_ptr.vmem [resolvable:$true] %s17
      %20 = dma.hbm_to_vmem [thread:$0]  %s0, 128, %s18, [#allocation3]
    $region5: #{tpu_custom_call.1} parent=1 // pred_fallthru
      _
    // Predicated region
    $region6: #{tpu_custom_call.1} parent=1 // pred_check
      _
    $region7: #{tpu_custom_call.1} parent=1 // pred_check_branch
      %22 = sbr.rel (0) target = $region9
    $region8: #{tpu_custom_call.1} parent=1 // pred_region
      %s24 = ssub.s32 512, 512
      %25 = vsyncadd [#allocation6], %s24
      %s26 = sshll.u32 [#allocation5], 4
      %s27 = int_to_ptr.vmem [resolvable:$true] %s26
      %32 = dma.hbm_to_vmem [thread:$0]  %s1, 512, %s27, [#allocation6], 128, 128, 8
    $region9: #{tpu_custom_call.1} parent=1 // pred_fallthru
      _
    // Predicated region
    $region10: #{tpu_custom_call.1} parent=1 // pred_check
      _
    $region11: #{tpu_custom_call.1} parent=1 // pred_check_branch
      %34 = sbr.rel (0) target = $region13
    $region12: #{tpu_custom_call.1} parent=1 // pred_region
      _
    $region13: #{tpu_custom_call.1} parent=1 // pred_fallthru
      _
    // Predicated region
    $region14: #{tpu_custom_call.1} parent=1 // pred_check
      _
    $region15: #{tpu_custom_call.1} parent=1 // pred_check_branch
      %36 = sbr.rel (0) target = $region17
    $region16: #{tpu_custom_call.1} parent=1 // pred_region
      %37 = dma.done [#allocation3], 128
    $region17: #{tpu_custom_call.1} parent=1 // pred_fallthru
      _
    // Predicated region
    $region18: #{tpu_custom_call.1} parent=1 // pred_check
      _
    $region19: #{tpu_custom_call.1} parent=1 // pred_check_branch
      %39 = sbr.rel (0) target = $region21
    $region20: #{tpu_custom_call.1} parent=1 // pred_region
      %40 = dma.done [#allocation6], 512
    $region21: #{tpu_custom_call.1} parent=1 // pred_fallthru
      _
    %v41 = vld [vmem:[#allocation2] sm:$0xff]
    %v42 = vld [vmem:[#allocation5] sm:$0xff]
    %v43 = vld [vmem:[#allocation5 + $0x8] sm:$0xff]
    %v44 = vld [vmem:[#allocation5 + $0x10] sm:$0xff]
    %v45 = vld [vmem:[#allocation5 + $0x18] sm:$0xff]
    %v46 = vld [vmem:[%s2] sm:$0x1]
    %v48 = vlaneseq
    %v49 = vshrl.u32 %v48, 7
    %v50 = vsub.s32 0, %v49
    %v51 = vrot.slane %v46, %v50
    %vm53 = vcmask 261120
    %v55 = vsel %vm53, %v41, 0
    %57 = vmatprep.subr.mxu0 0.0
    %58 = vmatpush1.msra.mxu0 %v42
    %59 = vmatprep.subr.mxu0 0.0
    %60 = vmatpush1.msra.mxu0 %v43
    %61 = vmatprep.subr.mxu0 0.0
    %62 = vmatpush1.msra.mxu0 %v44
    %63 = vmatprep.subr.mxu0 0.0
    %64 = vmatpush1.msra.mxu0 %v45
    %65 = vmatprep.subr.mxu0 0.0
    %66 = vmatpush1.msra.mxu0 0.0
    %67 = vmatprep.subr.mxu0 0.0
    %68 = vmatpush1.msra.mxu0 0.0
    %69 = vmatprep.subr.mxu0 0.0
    %70 = vmatpush1.msra.mxu0 0.0
    %71 = vmatprep.subr.mxu0 0.0
    %72 = vmatpush1.msra.mxu0 0.0
    %73 = vmatprep.subr.mxu0 0.0
    %74 = vmatpush1.msra.mxu0 0.0
    %75 = vmatprep.subr.mxu0 0.0
    %76 = vmatpush1.msra.mxu0 0.0
    %77 = vmatprep.subr.mxu0 0.0
    %78 = vmatpush1.msra.mxu0 0.0
    %79 = vmatprep.subr.mxu0 0.0
    %80 = vmatpush1.msra.mxu0 0.0
    %81 = vmatprep.subr.mxu0 0.0
    %82 = vmatpush1.msra.mxu0 0.0
    %83 = vmatprep.subr.mxu0 0.0
    %84 = vmatpush1.msra.mxu0 0.0
    %85 = vmatprep.subr.mxu0 0.0
    %86 = vmatpush1.msra.mxu0 0.0
    %87 = vmatprep.subr.mxu0 0.0
    %88 = vmatpush1.msra.mxu0 0.0
    %89 = vmatprep.subr.mxu0 0.0
    %90 = vmatpush1.msra.mxu0 0.0
    %91 = vmatprep.subr.mxu0 0.0
    %92 = vmatpush1.msra.mxu0 0.0
    %93 = vmatprep.subr.mxu0 0.0
    %94 = vmatpush1.msra.mxu0 0.0
    %95 = vmatprep.subr.mxu0 0.0
    %96 = vmatpush1.msra.mxu0 0.0
    %97 = vmatprep.subr.mxu0 0.0
    %98 = vmatpush1.msra.mxu0 0.0
    %99 = vmatprep.subr.mxu0 0.0
    %100 = vmatpush1.msra.mxu0 0.0
    %101 = vmatprep.subr.mxu0 0.0
    %102 = vmatpush1.msra.mxu0 0.0
    %103 = vmatprep.subr.mxu0 0.0
    %104 = vmatpush1.msra.mxu0 0.0
    %105 = vmatprep.subr.mxu0 0.0
    %106 = vmatpush1.msra.mxu0 0.0
    %107 = vmatprep.subr.mxu0 0.0
    %108 = vmatpush1.msra.mxu0 0.0
    %109 = vmatprep.subr.mxu0 0.0
    %110 = vmatpush1.msra.mxu0 0.0
    %111 = vmatprep.subr.mxu0 0.0
    %112 = vmatpush1.msra.mxu0 0.0
    %113 = vmatprep.subr.mxu0 0.0
    %114 = vmatpush1.msra.mxu0 0.0
    %115 = vmatprep.subr.mxu0 0.0
    %116 = vmatpush1.msra.mxu0 0.0
    %117 = vmatprep.subr.mxu0 0.0
    %118 = vmatpush1.msra.mxu0 0.0
    %119 = vmatprep.subr.mxu0 0.0
    %120 = vmatpush1.msra.mxu0 0.0
    %121 = vmatprep.mubr.f32.mxu0 0.0
    %122 = vmatmul.mubr.f32.gmra.mrb[0].mxu0 %v55
    %v123 = vpop.f32.mrb[0].mxu0
    %v124 = vadd.f32 %v51, %v123
    %v125 = vpop.f32.mrb[0].mxu0
    %126 = vdwg.mxu0
    %v127 = vmax.f32 %v124, 0.0
    %vm128 = vcmask 523264
    %129 = vst.msk [vmem:[#allocation7] sm:$0xff] %vm128, %v127
    // Predicated region
    $region22: #{tpu_custom_call.1} parent=1 // pred_check
      _
    $region23: #{tpu_custom_call.1} parent=1 // pred_check_branch
      %131 = sbr.rel (0) target = $region25
    $region24: #{tpu_custom_call.1} parent=1 // pred_region
      %s133 = ssub.s32 128, 128
      %134 = vsyncadd [#allocation4], %s133
      %s136 = sshll.u32 [#allocation7], 4
      %s137 = int_to_ptr.vmem [resolvable:$true] %s136
      %139 = dma.vmem_to_hbm [thread:$0]  %s137, 128, %s3, [#allocation4]
    $region25: #{tpu_custom_call.1} parent=1 // pred_fallthru
      _
    // Predicated region
    $region26: #{tpu_custom_call.1} parent=1 // pred_check
      _
    $region27: #{tpu_custom_call.1} parent=1 // pred_check_branch
      %141 = sbr.rel (0) target = $region29
    $region28: #{tpu_custom_call.1} parent=1 // pred_region
      %142 = dma.done [#allocation4], 128
    $region29: #{tpu_custom_call.1} parent=1 // pred_fallthru
      _
    %143 = vsyncpa [#allocation3], 1
    %144 = vsyncpa [#allocation6], 1
    %145 = vsyncpa [#allocation4], 1

</llo_original>
